<compile_context>
chip_gen: v7x
topology: tpu7x:2x2x1
jax: 0.10.0
libtpu: 0.0.40
codegen_flags: <defaults>
</compile_context>

<pallas_src>
import numpy as np
import jax
import jax.numpy as jnp
from jax.experimental import pallas as pl
from jax.experimental.pallas import tpu as pltpu

CIN, COUT, KH, KW = 3, 3, 5, 5
PAD = 2


def _srm_filters_np():
    # Exactly the fixed SRM filters from SRMLayer.__init__ (one plane each).
    q = [4.0, 12.0, 2.0]
    f1 = np.asarray([[0, 0, 0, 0, 0],
                     [0, -1, 2, -1, 0],
                     [0, 2, -4, 2, 0],
                     [0, -1, 2, -1, 0],
                     [0, 0, 0, 0, 0]], dtype=np.float64) / q[0]
    f2 = np.asarray([[-1, 2, -2, 2, -1],
                     [2, -6, 8, -6, 2],
                     [-2, 8, -12, 8, -2],
                     [2, -6, 8, -6, 2],
                     [-1, 2, -2, 2, -1]], dtype=np.float64) / q[1]
    f3 = np.asarray([[0, 0, 0, 0, 0],
                     [0, 0, 0, 0, 0],
                     [0, 1, -2, 1, 0],
                     [0, 0, 0, 0, 0],
                     [0, 0, 0, 0, 0]], dtype=np.float64) / q[2]
    return np.stack([f1, f2, f3]).astype(np.float32)          # (Cout, 5, 5)


def make_srm_weight():
    planes = _srm_filters_np()                                  # (3, 5, 5)
    filters = np.repeat(planes[:, None, :, :], CIN, axis=1)     # (3, 3, 5, 5)
    return jnp.asarray(filters)


def _vmem_capacity_bytes():
    try:
        return int(pltpu.get_tpu_info().vmem_capacity_bytes)
    except Exception:
        return 64 << 20          # conservative: v7x per-TensorCore VMEM


def _pick_batch_block(B, H, W, x_itemsize):
    """Largest divisor of B whose block fits a generation-aware VMEM budget,
    preferring a grid extent >= 2 (TensorCore split on v7x)."""
    HP, WP = H + 2 * PAD, W + 2 * PAD
    vmem_cap = _vmem_capacity_bytes()
    budget = max(2 << 20, vmem_cap // 12)     # ~10.6 MiB on 128 MiB parts, ~5.3 MiB on v7x
    per_img = (2 * (CIN * x_itemsize + COUT * 4) * H * W       # double-buffered in/out
               + HP * WP * 4                                    # padded channel sum
               + 2 * HP * W * 4                                 # hxc, u scratch
               + 6 * HP * W * 4)                                # elementwise temp headroom
    divisors = [d for d in range(1, B + 1) if B % d == 0]
    fitting = [d for d in divisors if d * per_img <= budget] or [1]
    geq2 = [d for d in fitting if B // d >= 2]
    return (geq2 or fitting)[-1], per_img


def srm_layer(x, weight, bias):
    """x: (B, 3, H, W), weight: (3, 3, 5, 5) concrete SRM filters, bias: (3,)."""
    B, C, H, W = x.shape
    assert C == CIN
    bias = bias.astype(jnp.float32)

    # Weights are fixed at module init -> concrete; the kernel bakes the SRM
    # structure (separable f1/f3, grouped f2) at trace time.
    w = np.asarray(jax.device_get(weight), dtype=np.float32)
    planes = _srm_filters_np()
    if not (w.shape == (COUT, CIN, KH, KW)
            and np.allclose(w, np.broadcast_to(planes[:, None], w.shape), atol=1e-6)):
        # TODO(synk): add a generic baked-tap fallback for retrained / non-SRM weights.
        raise NotImplementedError("srm_layer kernel is specialized to the fixed SRM filters")

    BB, per_img = _pick_batch_block(B, H, W, jnp.dtype(x.dtype).itemsize)
    HP, WP = H + 2 * PAD, W + 2 * PAD

    # Static row-chunk size: keep per-chunk temporaries near the vreg file
    # while bounding the unrolled chunk count.
    RC = min(H, max(8, (8 * 1024) // max(1, BB * W), -(-H // 64)))

    def kernel(x_ref, b_ref, o_ref, xs_ref, hxc_ref, u_ref):
        # x_ref  : VMEM (BB, CIN, H, W)   input block (native dtype)
        # b_ref  : SMEM f32 (COUT,)       bias
        # o_ref  : VMEM f32 (BB, COUT, H, W)
        # xs_ref : VMEM f32 (BB, HP, WP)  zero-padded channel-sum plane
        # hxc_ref: VMEM f32 (BB, HP, W)   horizontal [1,-2,1] 2nd difference
        # u_ref  : VMEM f32 (BB, HP, W)   hxc(c-1)+hxc(c+1)

        # --- padded channel-sum plane: zero only the PAD border strips ---
        xs_ref[:, 0:PAD, :] = jnp.zeros((BB, PAD, WP), jnp.float32)
        xs_ref[:, PAD + H:PAD + H + PAD, :] = jnp.zeros((BB, PAD, WP), jnp.float32)
        xs_ref[:, PAD:PAD + H, 0:PAD] = jnp.zeros((BB, H, PAD), jnp.float32)
        xs_ref[:, PAD:PAD + H, PAD + W:PAD + W + PAD] = jnp.zeros((BB, H, PAD), jnp.float32)
        xs_ref[:, PAD:PAD + H, PAD:PAD + W] = (
            x_ref[:, 0, :, :].astype(jnp.float32)
            + x_ref[:, 1, :, :].astype(jnp.float32)
            + x_ref[:, 2, :, :].astype(jnp.float32))

        # --- the 5 kw-shifted (lane-offset) reads happen once per block ---
        xs0 = xs_ref[:, :, 0:W]
        xs1 = xs_ref[:, :, 1:1 + W]
        xs2 = xs_ref[:, :, 2:2 + W]
        xs3 = xs_ref[:, :, 3:3 + W]
        xs4 = xs_ref[:, :, 4:4 + W]
        hxc_ref[...] = xs1 + xs3 - 2.0 * xs2
        u_ref[...] = xs0 + xs4 + 2.0 * (xs2 - xs1 - xs3)

        b0 = b_ref[0]
        b1 = b_ref[1]
        b2 = b_ref[2]

        # --- outputs in row chunks; all reads below are sublane offsets only ---
        for r0 in range(0, H, RC):
            rc = min(RC, H - r0)
            pr = r0 + PAD                     # padded row of first output row in chunk
            hx0 = hxc_ref[:, pr:pr + rc, :]
            v = hxc_ref[:, pr - 1:pr - 1 + rc, :] + hxc_ref[:, pr + 1:pr + 1 + rc, :]
            u0 = u_ref[:, pr:pr + rc, :]
            uv1 = u_ref[:, pr - 1:pr - 1 + rc, :] + u_ref[:, pr + 1:pr + 1 + rc, :]
            uv2 = u_ref[:, pr - 2:pr - 2 + rc, :] + u_ref[:, pr + 2:pr + 2 + rc, :]
            # f1 = -1/4 * [1,-2,1]^T (x) [1,-2,1]  (vertical 2nd diff of hxc)
            o_ref[:, 0, r0:r0 + rc, :] = (2.0 * hx0 - v) * 0.25 + b0
            # f2*12 = -(u[-2]+u[+2]) + 2*(u[-1]+u[+1] - u[0] - v) + 4*hx0
            o_ref[:, 1, r0:r0 + rc, :] = ((uv1 - u0 - v) * (1.0 / 6.0)
                                          + hx0 * (1.0 / 3.0)
                                          - uv2 * (1.0 / 12.0) + b1)
            # f3 = 1/2 * [1,-2,1]  (horizontal only)
            o_ref[:, 2, r0:r0 + rc, :] = hx0 * 0.5 + b2

    needed = BB * per_img + (2 << 20)
    vmem_limit = min(max(needed, 32 << 20), int(_vmem_capacity_bytes() * 0.9))

    # TODO(synk): for W <= 64, fold batch into the lane dim ((HP, BB*WP) layout with
    # per-image zero pads) for lane-dense loads/stores; kept NCHW here for simplicity.
    # TODO(synk): for single images too large for VMEM, add spatial grid tiling with
    # a 2-row halo (current row-chunking only bounds in-kernel temporaries).

    return pl.pallas_call(
        kernel,
        out_shape=jax.ShapeDtypeStruct((B, COUT, H, W), jnp.float32),
        grid=(B // BB,),
        in_specs=[
            pl.BlockSpec((BB, CIN, H, W), lambda b: (b, 0, 0, 0)),
            pl.BlockSpec(memory_space=pltpu.MemorySpace.SMEM),
        ],
        out_specs=pl.BlockSpec((BB, COUT, H, W), lambda b: (b, 0, 0, 0)),
        scratch_shapes=[
            pltpu.VMEM((BB, HP, WP), jnp.float32),
            pltpu.VMEM((BB, HP, W), jnp.float32),
            pltpu.VMEM((BB, HP, W), jnp.float32),
        ],
        compiler_params=pltpu.CompilerParams(
            dimension_semantics=("parallel",),
            vmem_limit_bytes=vmem_limit,
        ),
    )(x, bias)


if __name__ == "__main__":
    key = jax.random.PRNGKey(0)
    kx, kb = jax.random.split(key)

    # Small NCHW input consistent with the module (3 input channels required).
    x = jax.random.normal(kx, (2, 3, 16, 16), dtype=jnp.float32)

    weight = make_srm_weight()
    # nn.Conv2d default bias init: U(-1/sqrt(fan_in), 1/sqrt(fan_in)); deterministic here.
    bound = 1.0 / np.sqrt(CIN * KH * KW)
    bias = jax.random.uniform(kb, (COUT,), minval=-bound, maxval=bound,
                              dtype=jnp.float32)

    out = jax.block_until_ready(srm_layer(x, weight, bias))

    # Reference check against XLA's conv (same NCHW / OIHW conventions as torch).
    ref = jax.lax.conv_general_dilated(
        x, weight, window_strides=(1, 1), padding=((PAD, PAD), (PAD, PAD)),
        dimension_numbers=("NCHW", "OIHW", "NCHW")) + bias[None, :, None, None]
    np.testing.assert_allclose(np.asarray(out), np.asarray(ref),
                               rtol=1e-4, atol=1e-4)

    print("KERNEL_OK")
</pallas_src>

<mosaic_0001>
module attributes {stable_mosaic.version = 11 : i64} {
  func.func @kernel(%arg0: i32, %arg1: memref<1x3x16x16xf32, #tpu.memory_space<vmem>>, %arg2: memref<3xf32, #tpu.memory_space<smem>>, %arg3: memref<1x3x16x16xf32, #tpu.memory_space<vmem>>, %arg4: memref<1x20x20xf32, #tpu.memory_space<vmem>>, %arg5: memref<1x20x16xf32, #tpu.memory_space<vmem>>, %arg6: memref<1x20x16xf32, #tpu.memory_space<vmem>>) attributes {dimension_semantics = [#tpu.dimension_semantics<parallel>], iteration_bounds = array<i64: 2>, scalar_prefetch = 0 : i64, scratch_operands = 3 : i64, tpu.core_type = #tpu.core_type<tc>, window_params = [{transform_indices = @transform_0, window_bounds = array<i64: 1, 3, 16, 16>}, {transform_indices = @transform_1, window_bounds = array<i64: 3>}, {transform_indices = @transform_2, window_bounds = array<i64: 1, 3, 16, 16>}]} {
    %cst = arith.constant 0.000000e+00 : f32
    %0 = vector.broadcast %cst : f32 to vector<1x2x20xf32>
    %c0 = arith.constant 0 : index
    %c0_0 = arith.constant 0 : index
    %c0_1 = arith.constant 0 : index
    %1 = vector.load %arg4[%c0, %c0_0, %c0_1] : memref<1x20x20xf32, #tpu.memory_space<vmem>>, vector<1x2x20xf32>
    tpu.vector_store %arg4[%c0, %c0_0, %c0_1], %0 {strides = array<i32>} : memref<1x20x20xf32, #tpu.memory_space<vmem>>, vector<1x2x20xf32>,
    %cst_2 = arith.constant 0.000000e+00 : f32
    %2 = vector.broadcast %cst_2 : f32 to vector<1x2x20xf32>
    %c0_3 = arith.constant 0 : index
    %c18 = arith.constant 18 : index
    %c0_4 = arith.constant 0 : index
    %3 = vector.load %arg4[%c0_3, %c18, %c0_4] : memref<1x20x20xf32, #tpu.memory_space<vmem>>, vector<1x2x20xf32>
    tpu.vector_store %arg4[%c0_3, %c18, %c0_4], %2 {strides = array<i32>} : memref<1x20x20xf32, #tpu.memory_space<vmem>>, vector<1x2x20xf32>,
    %cst_5 = arith.constant 0.000000e+00 : f32
    %4 = vector.broadcast %cst_5 : f32 to vector<1x16x2xf32>
    %c0_6 = arith.constant 0 : index
    %c2 = arith.constant 2 : index
    %c0_7 = arith.constant 0 : index
    %5 = vector.load %arg4[%c0_6, %c2, %c0_7] : memref<1x20x20xf32, #tpu.memory_space<vmem>>, vector<1x16x2xf32>
    tpu.vector_store %arg4[%c0_6, %c2, %c0_7], %4 {strides = array<i32>} : memref<1x20x20xf32, #tpu.memory_space<vmem>>, vector<1x16x2xf32>,
    %cst_8 = arith.constant 0.000000e+00 : f32
    %6 = vector.broadcast %cst_8 : f32 to vector<1x16x2xf32>
    %c0_9 = arith.constant 0 : index
    %c2_10 = arith.constant 2 : index
    %c18_11 = arith.constant 18 : index
    %7 = vector.load %arg4[%c0_9, %c2_10, %c18_11] : memref<1x20x20xf32, #tpu.memory_space<vmem>>, vector<1x16x2xf32>
    tpu.vector_store %arg4[%c0_9, %c2_10, %c18_11], %6 {strides = array<i32>} : memref<1x20x20xf32, #tpu.memory_space<vmem>>, vector<1x16x2xf32>,
    %c0_12 = arith.constant 0 : index
    %c0_13 = arith.constant 0 : index
    %c0_14 = arith.constant 0 : index
    %c0_15 = arith.constant 0 : index
    %8 = vector.load %arg1[%c0_12, %c0_13, %c0_14, %c0_15] : memref<1x3x16x16xf32, #tpu.memory_space<vmem>>, vector<1x1x16x16xf32>
    %9 = vector.shape_cast %8 : vector<1x1x16x16xf32> to vector<1x16x16xf32>
    %c0_16 = arith.constant 0 : index
    %c1 = arith.constant 1 : index
    %c0_17 = arith.constant 0 : index
    %c0_18 = arith.constant 0 : index
    %10 = vector.load %arg1[%c0_16, %c1, %c0_17, %c0_18] : memref<1x3x16x16xf32, #tpu.memory_space<vmem>>, vector<1x1x16x16xf32>
    %11 = vector.shape_cast %10 : vector<1x1x16x16xf32> to vector<1x16x16xf32>
    %12 = arith.addf %9, %11 : vector<1x16x16xf32>
    %c0_19 = arith.constant 0 : index
    %c2_20 = arith.constant 2 : index
    %c0_21 = arith.constant 0 : index
    %c0_22 = arith.constant 0 : index
    %13 = vector.load %arg1[%c0_19, %c2_20, %c0_21, %c0_22] : memref<1x3x16x16xf32, #tpu.memory_space<vmem>>, vector<1x1x16x16xf32>
    %14 = vector.shape_cast %13 : vector<1x1x16x16xf32> to vector<1x16x16xf32>
    %15 = arith.addf %12, %14 : vector<1x16x16xf32>
    %c0_23 = arith.constant 0 : index
    %c2_24 = arith.constant 2 : index
    %c2_25 = arith.constant 2 : index
    %16 = vector.load %arg4[%c0_23, %c2_24, %c2_25] : memref<1x20x20xf32, #tpu.memory_space<vmem>>, vector<1x16x16xf32>
    tpu.vector_store %arg4[%c0_23, %c2_24, %c2_25], %15 {strides = array<i32>} : memref<1x20x20xf32, #tpu.memory_space<vmem>>, vector<1x16x16xf32>,
    %c0_26 = arith.constant 0 : index
    %c0_27 = arith.constant 0 : index
    %c0_28 = arith.constant 0 : index
    %17 = vector.load %arg4[%c0_26, %c0_27, %c0_28] : memref<1x20x20xf32, #tpu.memory_space<vmem>>, vector<1x20x16xf32>
    %c0_29 = arith.constant 0 : index
    %c0_30 = arith.constant 0 : index
    %c1_31 = arith.constant 1 : index
    %18 = vector.load %arg4[%c0_29, %c0_30, %c1_31] : memref<1x20x20xf32, #tpu.memory_space<vmem>>, vector<1x20x16xf32>
    %c0_32 = arith.constant 0 : index
    %c0_33 = arith.constant 0 : index
    %c2_34 = arith.constant 2 : index
    %19 = vector.load %arg4[%c0_32, %c0_33, %c2_34] : memref<1x20x20xf32, #tpu.memory_space<vmem>>, vector<1x20x16xf32>
    %c0_35 = arith.constant 0 : index
    %c0_36 = arith.constant 0 : index
    %c3 = arith.constant 3 : index
    %20 = vector.load %arg4[%c0_35, %c0_36, %c3] : memref<1x20x20xf32, #tpu.memory_space<vmem>>, vector<1x20x16xf32>
    %c0_37 = arith.constant 0 : index
    %c0_38 = arith.constant 0 : index
    %c4 = arith.constant 4 : index
    %21 = vector.load %arg4[%c0_37, %c0_38, %c4] : memref<1x20x20xf32, #tpu.memory_space<vmem>>, vector<1x20x16xf32>
    %22 = arith.addf %18, %20 : vector<1x20x16xf32>
    %cst_39 = arith.constant 2.000000e+00 : f32
    %23 = vector.broadcast %cst_39 : f32 to vector<1x20x16xf32>
    %24 = arith.mulf %23, %19 : vector<1x20x16xf32>
    %25 = arith.subf %22, %24 : vector<1x20x16xf32>
    %c0_40 = arith.constant 0 : index
    %c0_41 = arith.constant 0 : index
    %c0_42 = arith.constant 0 : index
    %26 = vector.load %arg5[%c0_40, %c0_41, %c0_42] : memref<1x20x16xf32, #tpu.memory_space<vmem>>, vector<1x20x16xf32>
    tpu.vector_store %arg5[%c0_40, %c0_41, %c0_42], %25 {strides = array<i32>} : memref<1x20x16xf32, #tpu.memory_space<vmem>>, vector<1x20x16xf32>,
    %27 = arith.addf %17, %21 : vector<1x20x16xf32>
    %28 = arith.subf %19, %18 : vector<1x20x16xf32>
    %29 = arith.subf %28, %20 : vector<1x20x16xf32>
    %cst_43 = arith.constant 2.000000e+00 : f32
    %30 = vector.broadcast %cst_43 : f32 to vector<1x20x16xf32>
    %31 = arith.mulf %30, %29 : vector<1x20x16xf32>
    %32 = arith.addf %27, %31 : vector<1x20x16xf32>
    %c0_44 = arith.constant 0 : index
    %c0_45 = arith.constant 0 : index
    %c0_46 = arith.constant 0 : index
    %33 = vector.load %arg6[%c0_44, %c0_45, %c0_46] : memref<1x20x16xf32, #tpu.memory_space<vmem>>, vector<1x20x16xf32>
    tpu.vector_store %arg6[%c0_44, %c0_45, %c0_46], %32 {strides = array<i32>} : memref<1x20x16xf32, #tpu.memory_space<vmem>>, vector<1x20x16xf32>,
    %c0_47 = arith.constant 0 : index
    %34 = memref.load %arg2[%c0_47] : memref<3xf32, #tpu.memory_space<smem>>
    %c1_48 = arith.constant 1 : index
    %35 = memref.load %arg2[%c1_48] : memref<3xf32, #tpu.memory_space<smem>>
    %c2_49 = arith.constant 2 : index
    %36 = memref.load %arg2[%c2_49] : memref<3xf32, #tpu.memory_space<smem>>
    %c0_50 = arith.constant 0 : index
    %c2_51 = arith.constant 2 : index
    %c0_52 = arith.constant 0 : index
    %37 = vector.load %arg5[%c0_50, %c2_51, %c0_52] : memref<1x20x16xf32, #tpu.memory_space<vmem>>, vector<1x16x16xf32>
    %c0_53 = arith.constant 0 : index
    %c1_54 = arith.constant 1 : index
    %c0_55 = arith.constant 0 : index
    %38 = vector.load %arg5[%c0_53, %c1_54, %c0_55] : memref<1x20x16xf32, #tpu.memory_space<vmem>>, vector<1x16x16xf32>
    %c0_56 = arith.constant 0 : index
    %c3_57 = arith.constant 3 : index
    %c0_58 = arith.constant 0 : index
    %39 = vector.load %arg5[%c0_56, %c3_57, %c0_58] : memref<1x20x16xf32, #tpu.memory_space<vmem>>, vector<1x16x16xf32>
    %40 = arith.addf %38, %39 : vector<1x16x16xf32>
    %c0_59 = arith.constant 0 : index
    %c2_60 = arith.constant 2 : index
    %c0_61 = arith.constant 0 : index
    %41 = vector.load %arg6[%c0_59, %c2_60, %c0_61] : memref<1x20x16xf32, #tpu.memory_space<vmem>>, vector<1x16x16xf32>
    %c0_62 = arith.constant 0 : index
    %c1_63 = arith.constant 1 : index
    %c0_64 = arith.constant 0 : index
    %42 = vector.load %arg6[%c0_62, %c1_63, %c0_64] : memref<1x20x16xf32, #tpu.memory_space<vmem>>, vector<1x16x16xf32>
    %c0_65 = arith.constant 0 : index
    %c3_66 = arith.constant 3 : index
    %c0_67 = arith.constant 0 : index
    %43 = vector.load %arg6[%c0_65, %c3_66, %c0_67] : memref<1x20x16xf32, #tpu.memory_space<vmem>>, vector<1x16x16xf32>
    %44 = arith.addf %42, %43 : vector<1x16x16xf32>
    %c0_68 = arith.constant 0 : index
    %c0_69 = arith.constant 0 : index
    %c0_70 = arith.constant 0 : index
    %45 = vector.load %arg6[%c0_68, %c0_69, %c0_70] : memref<1x20x16xf32, #tpu.memory_space<vmem>>, vector<1x16x16xf32>
    %c0_71 = arith.constant 0 : index
    %c4_72 = arith.constant 4 : index
    %c0_73 = arith.constant 0 : index
    %46 = vector.load %arg6[%c0_71, %c4_72, %c0_73] : memref<1x20x16xf32, #tpu.memory_space<vmem>>, vector<1x16x16xf32>
    %47 = arith.addf %45, %46 : vector<1x16x16xf32>
    %cst_74 = arith.constant 2.000000e+00 : f32
    %48 = vector.broadcast %cst_74 : f32 to vector<1x16x16xf32>
    %49 = arith.mulf %48, %37 : vector<1x16x16xf32>
    %50 = arith.subf %49, %40 : vector<1x16x16xf32>
    %cst_75 = arith.constant 2.500000e-01 : f32
    %51 = vector.broadcast %cst_75 : f32 to vector<1x16x16xf32>
    %52 = arith.mulf %50, %51 : vector<1x16x16xf32>
    %53 = vector.broadcast %34 : f32 to vector<1x16x16xf32>
    %54 = arith.addf %52, %53 : vector<1x16x16xf32>
    %c0_76 = arith.constant 0 : index
    %c0_77 = arith.constant 0 : index
    %c0_78 = arith.constant 0 : index
    %c0_79 = arith.constant 0 : index
    %55 = vector.load %arg3[%c0_76, %c0_77, %c0_78, %c0_79] : memref<1x3x16x16xf32, #tpu.memory_space<vmem>>, vector<1x1x16x16xf32>
    %56 = vector.shape_cast %55 : vector<1x1x16x16xf32> to vector<1x16x16xf32>
    %57 = vector.shape_cast %54 : vector<1x16x16xf32> to vector<1x1x16x16xf32>
    tpu.vector_store %arg3[%c0_76, %c0_77, %c0_78, %c0_79], %57 {strides = array<i32>} : memref<1x3x16x16xf32, #tpu.memory_space<vmem>>, vector<1x1x16x16xf32>,
    %58 = arith.subf %44, %41 : vector<1x16x16xf32>
    %59 = arith.subf %58, %40 : vector<1x16x16xf32>
    %cst_80 = arith.constant 0.166666672 : f32
    %60 = vector.broadcast %cst_80 : f32 to vector<1x16x16xf32>
    %61 = arith.mulf %59, %60 : vector<1x16x16xf32>
    %cst_81 = arith.constant 0.333333343 : f32
    %62 = vector.broadcast %cst_81 : f32 to vector<1x16x16xf32>
    %63 = arith.mulf %37, %62 : vector<1x16x16xf32>
    %64 = arith.addf %61, %63 : vector<1x16x16xf32>
    %cst_82 = arith.constant 0.0833333358 : f32
    %65 = vector.broadcast %cst_82 : f32 to vector<1x16x16xf32>
    %66 = arith.mulf %47, %65 : vector<1x16x16xf32>
    %67 = arith.subf %64, %66 : vector<1x16x16xf32>
    %68 = vector.broadcast %35 : f32 to vector<1x16x16xf32>
    %69 = arith.addf %67, %68 : vector<1x16x16xf32>
    %c0_83 = arith.constant 0 : index
    %c1_84 = arith.constant 1 : index
    %c0_85 = arith.constant 0 : index
    %c0_86 = arith.constant 0 : index
    %70 = vector.load %arg3[%c0_83, %c1_84, %c0_85, %c0_86] : memref<1x3x16x16xf32, #tpu.memory_space<vmem>>, vector<1x1x16x16xf32>
    %71 = vector.shape_cast %70 : vector<1x1x16x16xf32> to vector<1x16x16xf32>
    %72 = vector.shape_cast %69 : vector<1x16x16xf32> to vector<1x1x16x16xf32>
    tpu.vector_store %arg3[%c0_83, %c1_84, %c0_85, %c0_86], %72 {strides = array<i32>} : memref<1x3x16x16xf32, #tpu.memory_space<vmem>>, vector<1x1x16x16xf32>,
    %cst_87 = arith.constant 5.000000e-01 : f32
    %73 = vector.broadcast %cst_87 : f32 to vector<1x16x16xf32>
    %74 = arith.mulf %37, %73 : vector<1x16x16xf32>
    %75 = vector.broadcast %36 : f32 to vector<1x16x16xf32>
    %76 = arith.addf %74, %75 : vector<1x16x16xf32>
    %c0_88 = arith.constant 0 : index
    %c2_89 = arith.constant 2 : index
    %c0_90 = arith.constant 0 : index
    %c0_91 = arith.constant 0 : index
    %77 = vector.load %arg3[%c0_88, %c2_89, %c0_90, %c0_91] : memref<1x3x16x16xf32, #tpu.memory_space<vmem>>, vector<1x1x16x16xf32>
    %78 = vector.shape_cast %77 : vector<1x1x16x16xf32> to vector<1x16x16xf32>
    %79 = vector.shape_cast %76 : vector<1x16x16xf32> to vector<1x1x16x16xf32>
    tpu.vector_store %arg3[%c0_88, %c2_89, %c0_90, %c0_91], %79 {strides = array<i32>} : memref<1x3x16x16xf32, #tpu.memory_space<vmem>>, vector<1x1x16x16xf32>,
    return
  }
  func.func @transform_0(%arg0: i32) -> (i32, i32, i32, i32) {
    %c0_i32 = arith.constant 0 : i32
    %c0_i32_0 = arith.constant 0 : i32
    %c0_i32_1 = arith.constant 0 : i32
    %c0_i32_2 = arith.constant 0 : i32
    return %arg0, %c0_i32, %c0_i32_0, %c0_i32_1 : i32, i32, i32, i32
  }
  func.func @transform_1(%arg0: i32) -> i32 {
    %c0_i32 = arith.constant 0 : i32
    %c0_i32_0 = arith.constant 0 : i32
    return %c0_i32 : i32
  }
  func.func @transform_2(%arg0: i32) -> (i32, i32, i32, i32) {
    %c0_i32 = arith.constant 0 : i32
    %c0_i32_0 = arith.constant 0 : i32
    %c0_i32_1 = arith.constant 0 : i32
    %c0_i32_2 = arith.constant 0 : i32
    return %arg0, %c0_i32, %c0_i32_0, %c0_i32_1 : i32, i32, i32, i32
  }
}

</mosaic_0001>

<llo_original>
// kernel: tpu_custom_call.1
$region0: #{tpu_custom_call.1}
  #allocation0 [shape = 'u32[]', space=smem, size = 0x4, offset = 0x4, fixed_abs, tag = 'smem constant byte address 0x4 - core index']
  #allocation1 [shape = 'u32[144,128]{1,0:T(1,128)}', space=vmem, size = 0x12000, scoped, tag = 'internal scratch']
  #allocation2 [shape = 'f32[1,20,20]{2,1,0:T(8,128)}', space=vmem, size = 0x3000, scoped, tag = 'scratch operand']
  #allocation3 [shape = 'f32[1,20,16]{2,1,0:T(8,128)}', space=vmem, size = 0x3000, scoped, tag = 'scratch operand']
  #allocation4 [shape = 'f32[1,20,16]{2,1,0:T(8,128)}', space=vmem, size = 0x3000, scoped, tag = 'scratch operand']
  %s0 = inlined_call_operand.hbm [shape: f32[2,3,16,16], index: 0, kind: input, shape index: {}]
  %s1 = inlined_call_operand.vmem [shape: f32[3], index: 1, kind: input, shape index: {}]
  %s2 = inlined_call_operand.hbm [shape: f32[2,3,16,16], index: 2, kind: output, shape index: {}]
  %s3 = sld [smem:[#allocation0]]
  $region49: #{tpu_custom_call.1} parent=0
    _
  %s5 = ssub.s32 1, %s3
  %s6 = scalar_select 0, %s5, %s3
  $region1: #{tpu_custom_call.1} parent=0
    #allocation5 [shape = 'u8[49152]{0}', space=vmem, size = 0xc000, scoped, tag = 'input window, operand 0']
    #allocation6 [shape = 's32[2]{0}', space=sflag, size = 0x8, scoped, tag = 'scoped memory for tpu_custom_call.1']
    #allocation7 [shape = 's32[2]{0}', space=sflag, size = 0x8, scoped, tag = 'scoped memory for tpu_custom_call.1']
    #allocation8 [shape = 's32[2]{0}', space=sflag, size = 0x8, scoped, tag = 'scoped memory for tpu_custom_call.1']
    #allocation9 [shape = 'u8[512]{0}', space=smem, size = 0x200, scoped, tag = 'input window, operand 1, single buffered']
    #allocation10 [shape = 'u8[49152]{0}', space=vmem, size = 0xc000, scoped, tag = 'output window, operand 0']
    %7 = vsyncpa [#allocation6], 0
    %s8 = scalar_lea.sflag [#allocation6], 1
    %9 = vsyncpa %s8, 0
    %10 = vsyncpa [#allocation8], 0
    %11 = vsyncpa [#allocation7], 0
    %s12 = scalar_lea.sflag [#allocation7], 1
    %13 = vsyncpa %s12, 0
    loop: start=0, step=1, limit=4
    $region2: #{tpu_custom_call.1} parent=1 // loop_pre_header
      _
    $region3: #{tpu_custom_call.1} parent=1 // loop_header
      %s15 = sphi 0, %s19
      %p16 = scmp.ge.s32.totalorder %s15, 4
      %s25 = sphi 0, %s27
      %s28 = sphi 0, %s25
      %s29 = sphi 0, %s28
      %s45 = sphi 0, %s29
      %s49 = sphi 0, %s49
      %s51 = sphi 0, %s49
      %s52 = sphi 0, %s51
      %s66 = sphi 0, %s52
      %s72 = sphi 0, %s74
      %s75 = sphi 0, %s72
      %s76 = sphi 0, %s75
      %s92 = sphi 0, %s76
    $region4: #{tpu_custom_call.1} parent=1 // loop_header_branch
      %18 = sbr.rel (%p16) target = $region8
    $region5: #{tpu_custom_call.1} parent=1 // loop_body
      %s20 = ssub.s32 %s15, 1
      %s21 = ssub.s32 %s15, 2
      %s22 = sadd.s32 %s15, 1
      %s23 = ssub.s32 %s15, %s22
      %p24 = scmp.eq.s32.totalorder %s23, 0
      %s26 = sadd.s32 %s25, 1
      %s27 = scalar_select %p24, %s25, %s26
      %p30 = pneg %p24
      %p31 = scmp.eq.s32.totalorder %s15, 1
      %p32 = por %p30, %p31
      %p33 = scmp.ne.s32.totalorder %s25, %s28
      %p34 = scmp.eq.s32.totalorder %s15, 0
      %p35 = por %p33, %p34
      %p36 = scmp.ne.s32.totalorder %s25, %s28
      %p37 = scmp.eq.s32.totalorder %s20, 1
      %p38 = por %p36, %p37
      %p39 = scmp.ne.s32.totalorder %s28, %s29
      %p40 = scmp.eq.s32.totalorder %s20, 0
      %p41 = por %p39, %p40
      %p42 = scmp.ne.s32.totalorder %s28, %s29
      %p43 = scmp.eq.s32.totalorder %s21, 1
      %p44 = por %p42, %p43
      %p46 = scmp.ne.s32.totalorder %s29, %s45
      %p47 = scmp.eq.s32.totalorder %s21, 0
      %p48 = por %p46, %p47
      %s50 = sadd.s32 %s49, 1
      %p53 = scmp.eq.s32.totalorder %s15, 1
      %p54 = scmp.ne.s32.totalorder %s49, %s51
      %p55 = scmp.eq.s32.totalorder %s15, 0
      %p56 = por %p54, %p55
      %p57 = scmp.ne.s32.totalorder %s49, %s51
      %p58 = scmp.eq.s32.totalorder %s20, 1
      %p59 = por %p57, %p58
      %p60 = scmp.ne.s32.totalorder %s51, %s52
      %p61 = scmp.eq.s32.totalorder %s20, 0
      %p62 = por %p60, %p61
      %p63 = scmp.ne.s32.totalorder %s51, %s52
      %p64 = scmp.eq.s32.totalorder %s21, 1
      %p65 = por %p63, %p64
      %p67 = scmp.ne.s32.totalorder %s52, %s66
      %p68 = scmp.eq.s32.totalorder %s21, 0
      %p69 = por %p67, %p68
      %s70 = ssub.s32 %s15, %s22
      %p71 = scmp.eq.s32.totalorder %s70, 0
      %s73 = sadd.s32 %s72, 1
      %s74 = scalar_select %p71, %s72, %s73
      %p77 = pneg %p71
      %p78 = scmp.eq.s32.totalorder %s15, 1
      %p79 = por %p77, %p78
      %p80 = scmp.ne.s32.totalorder %s72, %s75
      %p81 = scmp.eq.s32.totalorder %s15, 0
      %p82 = por %p80, %p81
      %p83 = scmp.ne.s32.totalorder %s72, %s75
      %p84 = scmp.eq.s32.totalorder %s20, 1
      %p85 = por %p83, %p84
      %p86 = scmp.ne.s32.totalorder %s75, %s76
      %p87 = scmp.eq.s32.totalorder %s20, 0
      %p88 = por %p86, %p87
      %p89 = scmp.ne.s32.totalorder %s75, %s76
      %p90 = scmp.eq.s32.totalorder %s21, 1
      %p91 = por %p89, %p90
      %p93 = scmp.ne.s32.totalorder %s76, %s92
      %p94 = scmp.eq.s32.totalorder %s21, 0
      %p95 = por %p93, %p94
      %p96 = scmp.le.s32.totalorder 1, %s15
      %p97 = scmp.lt.s32.totalorder %s15, 3
      %p98 = pnand %p96, %p97
      %p99 = pneg %p98
      // Predicated region
      $region9: #{tpu_custom_call.1} parent=5 // pred_check
        _
      $region10: #{tpu_custom_call.1} parent=5 // pred_check_branch
        %101 = sbr.rel (%p98) target = $region12
      $region11: #{tpu_custom_call.1} parent=5 // pred_region
        %s102 = ssub.s32 %s15, 1
        // Predicated region
        $region13: #{tpu_custom_call.1} parent=11 // pred_check
          %p103 = pneg %p62
        $region14: #{tpu_custom_call.1} parent=11 // pred_check_branch
          %105 = sbr.rel (%p103) target = $region16
        $region15: #{tpu_custom_call.1} parent=11 // pred_region
          %s107 = ssub.s32 16, 16
          %108 = vsyncadd [#allocation8], %s107
          %s110 = sshll.u32 %s1, 4
          %s111 = int_to_ptr.vmem [resolvable:$true] %s110
          %113 = dma.vmem_to_smem %s111, 16, [#allocation9], [#allocation8]
        $region16: #{tpu_custom_call.1} parent=11 // pred_fallthru
          _
      $region12: #{tpu_custom_call.1} parent=5 // pred_fallthru
        _
      %p114 = scmp.lt.s32.totalorder %s15, 2
      // Predicated region
      $region17: #{tpu_custom_call.1} parent=5 // pred_check
        %p115 = pneg %p114
      $region18: #{tpu_custom_call.1} parent=5 // pred_check_branch
        %117 = sbr.rel (%p115) target = $region20
      $region19: #{tpu_custom_call.1} parent=5 // pred_region
        // Predicated region
        $region21: #{tpu_custom_call.1} parent=19 // pred_check
          %p118 = pneg %p35
        $region22: #{tpu_custom_call.1} parent=19 // pred_check_branch
          %120 = sbr.rel (%p118) target = $region24
        $region23: #{tpu_custom_call.1} parent=19 // pred_region
          %s121 = sand.u32 %s25, 1
          %s122 = scalar_lea.sflag [#allocation6], %s121
          %s123 = sand.u32 %s25, 1
          %s124 = smul.addr %s123, 48
          %s125 = scalar_lea.vmem [#allocation5], %s124
          %s127 = ssub.s32 768, 768
          %128 = vsyncadd %s122, %s127
          %s129 = smul.addr %s15, 6
          %s130 = smul.addr %s129, 128
          %s131 = scalar_lea.hbm %s0, %s130
          %s132 = sshll.u32 %s125, 4
          %s133 = int_to_ptr.vmem [resolvable:$true] %s132
          %138 = dma.hbm_to_vmem [thread:$0]  %s131, 768, %s133, %s122, 128, 128, 8
        $region24: #{tpu_custom_call.1} parent=19 // pred_fallthru
          _
      $region20: #{tpu_custom_call.1} parent=5 // pred_fallthru
        _
      %p139 = scmp.le.s32.totalorder 1, %s15
      %p140 = scmp.lt.s32.totalorder %s15, 3
      %p141 = pnand %p139, %p140
      %p142 = pneg %p141
      // Predicated region
      $region25: #{tpu_custom_call.1} parent=5 // pred_check
        _
      $region26: #{tpu_custom_call.1} parent=5 // pred_check_branch
        %144 = sbr.rel (%p141) target = $region28
      $region27: #{tpu_custom_call.1} parent=5 // pred_region
        %s145 = ssub.s32 %s15, 1
        %s146 = sand.u32 %s28, 1
        %s147 = scalar_lea.sflag [#allocation6], %s146
        %s148 = sand.u32 %s28, 1
        %s149 = smul.addr %s148, 48
        %s150 = scalar_lea.vmem [#allocation5], %s149
        // Predicated region
        $region29: #{tpu_custom_call.1} parent=27 // pred_check
          %p151 = pneg %p41
        $region30: #{tpu_custom_call.1} parent=27 // pred_check_branch
          %153 = sbr.rel (%p151) target = $region32
        $region31: #{tpu_custom_call.1} parent=27 // pred_region
          %154 = dma.done %s147, 768
        $region32: #{tpu_custom_call.1} parent=27 // pred_fallthru
          _
        // Predicated region
        $region33: #{tpu_custom_call.1} parent=27 // pred_check
          %p155 = pneg %p62
        $region34: #{tpu_custom_call.1} parent=27 // pred_check_branch
          %157 = sbr.rel (%p155) target = $region36
        $region35: #{tpu_custom_call.1} parent=27 // pred_region
          %158 = dma.done [#allocation8], 16
        $region36: #{tpu_custom_call.1} parent=27 // pred_fallthru
          _
        %159 = sfence
        %s160 = sand.u32 %s28, 1
        %s161 = scalar_lea.sflag [#allocation6], %s160
        %s162 = sand.u32 %s28, 1
        %s163 = smul.addr %s162, 48
        %s164 = scalar_lea.vmem [#allocation5], %s163
        %p165 = pneg %p41
        %p166 = pneg %p38
        %p167 = pneg %p62
        %p168 = pneg %p59
        %p169 = pneg %p88
        %p170 = pneg %p85
        %s171 = sand.u32 %s75, 1
        %s172 = scalar_lea.sflag [#allocation7], %s171
        %s173 = sand.u32 %s75, 1
        %s174 = smul.addr %s173, 48
        %s175 = scalar_lea.vmem [#allocation10], %s174
        %vm176 = vcmask 156672
        %177 = vst.msk [vmem:[#allocation2] sm:$0x3] %vm176, 0.0
        %178 = vst.msk [vmem:[#allocation2 + $0x12] sm:$0x3] %vm176, 0.0
        %vm179 = vcmask 15360
        %180 = vst.msk [vmem:[#allocation2 + $0x2] sm:$0xff] %vm179, 0.0
        %181 = vst.msk [vmem:[#allocation2 + $0xa] sm:$0xff] %vm179, 0.0
        %vm182 = vcmask 162960
        %183 = vst.msk [vmem:[#allocation2 + $0x2] sm:$0xff] %vm182, 0.0
        %184 = vst.msk [vmem:[#allocation2 + $0xa] sm:$0xff] %vm182, 0.0
        %v185 = vld [vmem:[%s150] sm:$0xff]
        %v186 = vld [vmem:[%s150 + $0x8] sm:$0xff]
        %s187 = scalar_lea.vmem %s150, 16 [#allocation5]
        %v188 = vld [vmem:[%s187] sm:$0xff]
        %v189 = vld [vmem:[%s187 + $0x8] sm:$0xff]
        %v190 = vadd.f32 %v185, %v188
        %v191 = vadd.f32 %v186, %v189
        %s192 = scalar_lea.vmem %s150, 32 [#allocation5]
        %v193 = vld [vmem:[%s192] sm:$0xff]
        %v194 = vld [vmem:[%s192 + $0x8] sm:$0xff]
        %v195 = vadd.f32 %v190, %v193
        %v196 = vadd.f32 %v191, %v194
        %199 = vrot.lane.b32.xlu0 %v195, 2
        %v200 = vpop.permute.xlu0 %199
        %201 = vrot.lane.b32.xlu0 %v196, 2
        %v202 = vpop.permute.xlu0 %201
        %vm205 = vcmask 146448
        %206 = vst.msk [vmem:[#allocation2 + $0x2] sm:$0xff] %vm205, %v200
        %207 = vst.msk [vmem:[#allocation2 + $0xa] sm:$0xff] %vm205, %v202
        %v208 = vld [vmem:[#allocation2] sm:$0xff]
        %v209 = vld [vmem:[#allocation2 + $0x8] sm:$0xff]
        %v210 = vld [vmem:[#allocation2 + $0x10] sm:$0xf]
        %214 = vrot.lane.b32.xlu0 %v208, 126
        %v215 = vpop.permute.xlu0 %214
        %216 = vrot.lane.b32.xlu0 %v209, 126
        %v217 = vpop.permute.xlu0 %216
        %218 = vrot.lane.b32.xlu0 %v210, 126
        %v219 = vpop.permute.xlu0 %218
        %v223 = vadd.f32 %v208, %v215
        %v224 = vadd.f32 %v209, %v217
        %v225 = vadd.f32 %v210, %v219
        %v226 = vmul.f32 %v208, 2.0
        %v227 = vmul.f32 %v209, 2.0
        %v228 = vmul.f32 %v210, 2.0
        %232 = vrot.lane.b32.xlu0 %v226, 127
        %v233 = vpop.permute.xlu0 %232
        %234 = vrot.lane.b32.xlu0 %v227, 127
        %v235 = vpop.permute.xlu0 %234
        %236 = vrot.lane.b32.xlu0 %v228, 127
        %v237 = vpop.permute.xlu0 %236
        %v241 = vsub.f32 %v223, %v233
        %v242 = vsub.f32 %v224, %v235
        %v243 = vsub.f32 %v225, %v237
        %247 = vrot.lane.b32.xlu0 %v241, 127
        %v248 = vpop.permute.xlu0 %247
        %249 = vrot.lane.b32.xlu0 %v242, 127
        %v250 = vpop.permute.xlu0 %249
        %251 = vrot.lane.b32.xlu0 %v243, 127
        %v252 = vpop.permute.xlu0 %251
        %vm256 = vcmask 130048
        %257 = vst.msk [vmem:[#allocation3] sm:$0xff] %vm256, %v248
        %258 = vst.msk [vmem:[#allocation3 + $0x8] sm:$0xff] %vm256, %v250
        %vm259 = vcmask 125952
        %260 = vst.msk [vmem:[#allocation3 + $0x10] sm:$0xf] %vm259, %v252
        %261 = vrot.lane.b32.xlu0 %v208, 124
        %v262 = vpop.permute.xlu0 %261
        %263 = vrot.lane.b32.xlu0 %v209, 124
        %v264 = vpop.permute.xlu0 %263
        %265 = vrot.lane.b32.xlu0 %v210, 124
        %v266 = vpop.permute.xlu0 %265
        %v270 = vadd.f32 %v208, %v262
        %v271 = vadd.f32 %v209, %v264
        %v272 = vadd.f32 %v210, %v266
        %273 = vrot.lane.b32.xlu0 %v208, 1
        %v274 = vpop.permute.xlu0 %273
        %275 = vrot.lane.b32.xlu0 %v209, 1
        %v276 = vpop.permute.xlu0 %275
        %277 = vrot.lane.b32.xlu0 %v210, 1
        %v278 = vpop.permute.xlu0 %277
        %v282 = vsub.f32 %v208, %v274
        %v283 = vsub.f32 %v209, %v276
        %v284 = vsub.f32 %v210, %v278
        %285 = vrot.lane.b32.xlu0 %v208, 127
        %v286 = vpop.permute.xlu0 %285
        %287 = vrot.lane.b32.xlu0 %v209, 127
        %v288 = vpop.permute.xlu0 %287
        %289 = vrot.lane.b32.xlu0 %v210, 127
        %v290 = vpop.permute.xlu0 %289
        %v294 = vsub.f32 %v282, %v286
        %v295 = vsub.f32 %v283, %v288
        %v296 = vsub.f32 %v284, %v290
        %v297 = vmul.f32 %v294, 2.0
        %v298 = vmul.f32 %v295, 2.0
        %v299 = vmul.f32 %v296, 2.0
        %303 = vrot.lane.b32.xlu0 %v297, 126
        %v304 = vpop.permute.xlu0 %303
        %305 = vrot.lane.b32.xlu0 %v298, 126
        %v306 = vpop.permute.xlu0 %305
        %307 = vrot.lane.b32.xlu0 %v299, 126
        %v308 = vpop.permute.xlu0 %307
        %v312 = vadd.f32 %v270, %v304
        %v313 = vadd.f32 %v271, %v306
        %v314 = vadd.f32 %v272, %v308
        %315 = vst.msk [vmem:[#allocation4] sm:$0xff] %vm256, %v312
        %316 = vst.msk [vmem:[#allocation4 + $0x8] sm:$0xff] %vm256, %v313
        %317 = vst.msk [vmem:[#allocation4 + $0x10] sm:$0xf] %vm259, %v314
        %s318 = sld [smem:[#allocation9]]
        %s319 = sld [smem:[#allocation9 + $0x1]]
        %s320 = sld [smem:[#allocation9 + $0x2]]
        %v321 = vld [vmem:[#allocation3 + $0x2] sm:$0xff]
        %v322 = vld [vmem:[#allocation3 + $0xa] sm:$0xff]
        %v323 = vld [vmem:[#allocation3 + $0x1] sm:$0xff]
        %v324 = vld [vmem:[#allocation3 + $0x9] sm:$0xff]
        %v325 = vld [vmem:[#allocation3 + $0x3] sm:$0xff]
        %v326 = vld [vmem:[#allocation3 + $0xb] sm:$0xff]
        %v327 = vadd.f32 %v323, %v325
        %v328 = vadd.f32 %v324, %v326
        %v329 = vld [vmem:[#allocation4 + $0x2] sm:$0xff]
        %v330 = vld [vmem:[#allocation4 + $0xa] sm:$0xff]
        %v331 = vld [vmem:[#allocation4 + $0x1] sm:$0xff]
        %v332 = vld [vmem:[#allocation4 + $0x9] sm:$0xff]
        %v333 = vld [vmem:[#allocation4 + $0x3] sm:$0xff]
        %v334 = vld [vmem:[#allocation4 + $0xb] sm:$0xff]
        %v335 = vadd.f32 %v331, %v333
        %v336 = vadd.f32 %v332, %v334
        %v337 = vld [vmem:[#allocation4] sm:$0xff]
        %v338 = vld [vmem:[#allocation4 + $0x8] sm:$0xff]
        %v339 = vld [vmem:[#allocation4 + $0x4] sm:$0xff]
        %v340 = vld [vmem:[#allocation4 + $0xc] sm:$0xff]
        %v341 = vadd.f32 %v337, %v339
        %v342 = vadd.f32 %v338, %v340
        %v343 = vmul.f32 %v321, 2.0
        %v344 = vmul.f32 %v322, 2.0
        %v345 = vsub.f32 %v343, %v327
        %v346 = vsub.f32 %v344, %v328
        %v347 = vmul.f32 %v345, 0.25
        %v348 = vmul.f32 %v346, 0.25
        %v349 = vstv %s318
        %v350 = vadd.f32 %v347, %v349
        %v351 = vadd.f32 %v348, %v349
        %352 = vst.msk [vmem:[%s175] sm:$0xff] %vm256, %v350
        %353 = vst.msk [vmem:[%s175 + $0x8] sm:$0xff] %vm256, %v351
        %v354 = vsub.f32 %v335, %v329
        %v355 = vsub.f32 %v336, %v330
        %v356 = vsub.f32 %v354, %v327
        %v357 = vsub.f32 %v355, %v328
        %v358 = vmul.f32 %v356, 0.16666667
        %v359 = vmul.f32 %v357, 0.16666667
        %v360 = vmul.f32 %v321, 0.33333334
        %v361 = vmul.f32 %v322, 0.33333334
        %v362 = vadd.f32 %v358, %v360
        %v363 = vadd.f32 %v359, %v361
        %v364 = vmul.f32 %v341, 0.083333336
        %v365 = vmul.f32 %v342, 0.083333336
        %v366 = vsub.f32 %v362, %v364
        %v367 = vsub.f32 %v363, %v365
        %v368 = vstv %s319
        %v369 = vadd.f32 %v366, %v368
        %v370 = vadd.f32 %v367, %v368
        %s371 = scalar_lea.vmem %s175, 16 [#allocation10]
        %372 = vst.msk [vmem:[%s371] sm:$0xff] %vm256, %v369
        %373 = vst.msk [vmem:[%s371 + $0x8] sm:$0xff] %vm256, %v370
        %v374 = vmul.f32 %v321, 0.5
        %v375 = vmul.f32 %v322, 0.5
        %v376 = vstv %s320
        %v377 = vadd.f32 %v374, %v376
        %v378 = vadd.f32 %v375, %v376
        %s379 = scalar_lea.vmem %s175, 32 [#allocation10]
        %380 = vst.msk [vmem:[%s379] sm:$0xff] %vm256, %v377
        %381 = vst.msk [vmem:[%s379 + $0x8] sm:$0xff] %vm256, %v378
        %s382 = sand.u32 %s75, 1
        %s383 = scalar_lea.sflag [#allocation7], %s382
        %s384 = sand.u32 %s75, 1
        %s385 = smul.addr %s384, 48
        %s386 = scalar_lea.vmem [#allocation10], %s385
        // Predicated region
        $region37: #{tpu_custom_call.1} parent=27 // pred_check
          %p387 = pneg %p85
        $region38: #{tpu_custom_call.1} parent=27 // pred_check_branch
          %389 = sbr.rel (%p387) target = $region40
        $region39: #{tpu_custom_call.1} parent=27 // pred_region
          %s391 = ssub.s32 768, 768
          %392 = vsyncadd %s383, %s391
          %s393 = smul.addr %s20, 6
          %s394 = smul.addr %s393, 128
          %s395 = scalar_lea.hbm %s2, %s394
          %s396 = sshll.u32 %s386, 4
          %s397 = int_to_ptr.vmem [resolvable:$true] %s396
          %402 = dma.vmem_to_hbm [thread:$0]  %s397, 768, %s395, %s383, 128, 128, 8
        $region40: #{tpu_custom_call.1} parent=27 // pred_fallthru
          _
      $region28: #{tpu_custom_call.1} parent=5 // pred_fallthru
        _
      %p403 = scmp.le.s32.totalorder 2, %s15
      // Predicated region
      $region41: #{tpu_custom_call.1} parent=5 // pred_check
        %p404 = pneg %p403
      $region42: #{tpu_custom_call.1} parent=5 // pred_check_branch
        %406 = sbr.rel (%p404) target = $region44
      $region43: #{tpu_custom_call.1} parent=5 // pred_region
        %s407 = ssub.s32 %s15, 2
        // Predicated region
        $region45: #{tpu_custom_call.1} parent=43 // pred_check
          %p408 = pneg %p91
        $region46: #{tpu_custom_call.1} parent=43 // pred_check_branch
          %410 = sbr.rel (%p408) target = $region48
        $region47: #{tpu_custom_call.1} parent=43 // pred_region
          %s411 = sand.u32 %s76, 1
          %s412 = scalar_lea.sflag [#allocation7], %s411
          %s413 = sand.u32 %s76, 1
          %s414 = smul.addr %s413, 48
          %s415 = scalar_lea.vmem [#allocation10], %s414
          %416 = dma.done %s412, 768
        $region48: #{tpu_custom_call.1} parent=43 // pred_fallthru
          _
      $region44: #{tpu_custom_call.1} parent=5 // pred_fallthru
        _
    $region6: #{tpu_custom_call.1} parent=1 // loop_footer
      %s19 = sadd.s32 1, %s15
    $region7: #{tpu_custom_call.1} parent=1 // loop_footer_branch
      %14 = sbr.rel target = $region3
    $region8: #{tpu_custom_call.1} parent=1 // loop_exit
      _
    %417 = vsyncpa [#allocation6], 1
    %s418 = scalar_lea.sflag [#allocation6], 1
    %419 = vsyncpa %s418, 1
    %420 = vsyncpa [#allocation7], 1
    %s421 = scalar_lea.sflag [#allocation7], 1
    %422 = vsyncpa %s421, 1
    %423 = vsyncpa [#allocation8], 1
    %s424 = scalar_lea.sflag [#allocation8], 1
    %425 = vsyncpa %s424, 1

</llo_original>
